<compile_context>
chip_gen: v7x
topology: tpu7x:2x2x1
jax: 0.10.0
libtpu: 0.0.40
codegen_flags: <defaults>
</compile_context>

<pallas_src>
import jax
import jax.numpy as jnp
from jax.experimental import pallas as pl
from jax.experimental.pallas import tpu as pltpu

PROJ = 256  # internal projection width of TransCell (hard-coded in the module)


def _trans_cell_kernel(tm_ref, rm_ref, w_ref, z_ref, out_ref):
    # One grid step == one batch element b.
    #   tm_ref : (1, N, N, E)  edge features (bf16 or f32)   [N_i, N_j, E]
    #   rm_ref : (1, N, N)     relation mask (0/1 floats)    [N_i, N_j]
    #   w_ref  : (1, 1, E)     folded per-batch weight w_b (f32)
    #   z_ref  : (1, 1, N)     previous attention logits row z_b (f32)
    #   out_ref: (1, N, 1)     output logits for batch b
    tm = tm_ref[0].astype(jnp.float32)                     # (N_i, N_j, E)
    w = w_ref[0]                                           # (1, E) -> broadcasts over E

    # relation[b, i, j] up to a per-batch constant that cancels in the softmax.
    rel = jnp.sum(tm * w, axis=-1)                         # (N_i, N_j) f32

    # masked softmax over i (torch dim=1) == axis 0 here.
    # Large finite negative instead of -inf: identical result whenever a column has at
    # least one valid entry (exp underflows to exactly 0); avoids NaN on fully-masked
    # columns (yields uniform weights there instead of PyTorch's NaN).
    rm = rm_ref[0]                                         # (N_i, N_j)
    masked = jnp.where(rm == 0.0, jnp.float32(-1e30), rel)
    m = jnp.max(masked, axis=0, keepdims=True)             # (1, N_j)
    e = jnp.exp(masked - m)                                # (N_i, N_j)
    s = jnp.sum(e, axis=0, keepdims=True)                  # (1, N_j)
    sm = e / s                                             # (N_i, N_j), cols sum to 1

    # logits[b, i] = sum_j sm[i, j] * z[b, j]   (exact f32 multiply + lane reduce;
    # for large N this would become an MXU matvec).
    out_ref[0] = jnp.sum(sm * z_ref[0], axis=-1, keepdims=True)   # (N_i, 1)


def trans_cell_forward(q, trans_mat, r_mask, z_logits, params,
                       compute_dtype=jnp.bfloat16):
    """q:(B,H) trans_mat:(B,N,N,E) r_mask:(B,N,N) z_logits:(B,N) -> logits (B,N)."""
    B, N, _, E = trans_mat.shape
    hp = jax.lax.Precision.HIGHEST

    # ---- fold linear_r / linear_q / linear_out into a per-batch (E,) vector ----
    # (tiny matmuls; done once per call, outside the HBM-bound kernel)
    wo_vec = params["wo"].reshape(-1)                                    # (PROJ,)
    qv = jnp.dot(q, params["wq"].T, precision=hp) + params["bq"]         # (B, PROJ)
    w = jnp.dot(qv * wo_vec, params["wr"], precision=hp)                 # (B, E)
    # br/bo only add a per-batch constant to relation -> cancels in softmax over i.

    tm = trans_mat.astype(compute_dtype)          # bf16 halves the dominant HBM stream
    w3 = w.astype(jnp.float32).reshape(B, 1, E)
    z3 = z_logits.astype(jnp.float32).reshape(B, 1, N)
    rm = r_mask.astype(jnp.float32)

    out = pl.pallas_call(
        _trans_cell_kernel,
        out_shape=jax.ShapeDtypeStruct((B, N, 1), jnp.float32),
        grid=(B,),
        in_specs=[
            pl.BlockSpec((1, N, N, E), lambda b: (b, 0, 0, 0)),   # trans_mat (whole batch elem)
            pl.BlockSpec((1, N, N), lambda b: (b, 0, 0)),         # r_mask
            pl.BlockSpec((1, 1, E), lambda b: (b, 0, 0)),         # folded weight w_b
            pl.BlockSpec((1, 1, N), lambda b: (b, 0, 0)),         # z logits row
        ],
        out_specs=pl.BlockSpec((1, N, 1), lambda b: (b, 0, 0)),
        compiler_params=pltpu.CompilerParams(
            dimension_semantics=("parallel",)),                   # shards batch over TCs
    )(tm, rm, w3, z3)

    return out[..., 0]                                            # (B, N)


def trans_cell_ref(q, trans_mat, r_mask, z_logits, params):
    """Pure-JAX reference mirroring the PyTorch forward (full 256-wide projection)."""
    hp = jax.lax.Precision.HIGHEST
    h = jnp.einsum("bije,oe->bijo", trans_mat, params["wr"], precision=hp) + params["br"]
    qv = jnp.einsum("bh,oh->bo", q, params["wq"], precision=hp) + params["bq"]
    rel = jnp.einsum("bijo,o->bij", h * qv[:, None, None, :], params["wo"][0],
                     precision=hp) + params["bo"][0]
    masked = jnp.where(r_mask == 0.0, -jnp.inf, rel)
    rel_mat = jax.nn.softmax(masked, axis=1)
    return jnp.einsum("bij,bj->bi", rel_mat, z_logits, precision=hp)


if __name__ == "__main__":
    B, N, E, H = 2, 8, 16, 32   # batch, num_obj, edge_size, hidden_size
    key = jax.random.PRNGKey(0)
    ks = jax.random.split(key, 10)

    # Deterministic synthetic parameters (PyTorch nn.Linear convention: W is (out, in)).
    params = {
        "wr": 0.1 * jax.random.normal(ks[0], (PROJ, E), jnp.float32),
        "br": 0.1 * jax.random.normal(ks[1], (PROJ,), jnp.float32),
        "wq": 0.1 * jax.random.normal(ks[2], (PROJ, H), jnp.float32),
        "bq": 0.1 * jax.random.normal(ks[3], (PROJ,), jnp.float32),
        "wo": 0.1 * jax.random.normal(ks[4], (1, PROJ), jnp.float32),
        "bo": 0.1 * jax.random.normal(ks[5], (1,), jnp.float32),
    }

    q = jax.random.normal(ks[6], (B, H), jnp.float32)
    trans_mat = jax.random.normal(ks[7], (B, N, N, E), jnp.float32)
    r_mask = (jax.random.uniform(ks[8], (B, N, N)) > 0.3).astype(jnp.float32)
    r_mask = r_mask.at[:, 0, :].set(1.0)   # keep every softmax column non-empty
    z_logits = jax.random.normal(ks[9], (B, N), jnp.float32)

    ref = trans_cell_ref(q, trans_mat, r_mask, z_logits, params)

    # f32 path: tight check of the folded-kernel math against the full reference.
    out_f32 = jax.block_until_ready(
        trans_cell_forward(q, trans_mat, r_mask, z_logits, params,
                           compute_dtype=jnp.float32))
    assert out_f32.shape == (B, N)
    assert jnp.allclose(out_f32, ref, atol=1e-3, rtol=1e-3), (out_f32, ref)

    # bf16 path (default): halves the dominant trans_mat HBM stream; softmax/accum in f32.
    out_bf16 = jax.block_until_ready(
        trans_cell_forward(q, trans_mat, r_mask, z_logits, params,
                           compute_dtype=jnp.bfloat16))
    assert out_bf16.shape == (B, N)
    assert jnp.allclose(out_bf16, ref, atol=5e-2, rtol=5e-2), (out_bf16, ref)

    print("KERNEL_OK")
</pallas_src>

<mosaic_0001>
module attributes {stable_mosaic.version = 11 : i64} {
  func.func @_trans_cell_kernel(%arg0: i32, %arg1: memref<1x8x8x16xf32, #tpu.memory_space<vmem>>, %arg2: memref<1x8x8xf32, #tpu.memory_space<vmem>>, %arg3: memref<1x1x16xf32, #tpu.memory_space<vmem>>, %arg4: memref<1x1x8xf32, #tpu.memory_space<vmem>>, %arg5: memref<1x8x1xf32, #tpu.memory_space<vmem>>) attributes {dimension_semantics = [#tpu.dimension_semantics<parallel>], iteration_bounds = array<i64: 2>, scalar_prefetch = 0 : i64, scratch_operands = 0 : i64, tpu.core_type = #tpu.core_type<tc>, window_params = [{transform_indices = @transform_0, window_bounds = array<i64: 1, 8, 8, 16>}, {transform_indices = @transform_1, window_bounds = array<i64: 1, 8, 8>}, {transform_indices = @transform_2, window_bounds = array<i64: 1, 1, 16>}, {transform_indices = @transform_3, window_bounds = array<i64: 1, 1, 8>}, {transform_indices = @transform_4, window_bounds = array<i64: 1, 8, 1>}]} {
    %c0 = arith.constant 0 : index
    %c0_0 = arith.constant 0 : index
    %c0_1 = arith.constant 0 : index
    %c0_2 = arith.constant 0 : index
    %0 = vector.load %arg1[%c0, %c0_0, %c0_1, %c0_2] : memref<1x8x8x16xf32, #tpu.memory_space<vmem>>, vector<1x8x8x16xf32>
    %1 = vector.shape_cast %0 : vector<1x8x8x16xf32> to vector<8x8x16xf32>
    %c0_3 = arith.constant 0 : index
    %c0_4 = arith.constant 0 : index
    %c0_5 = arith.constant 0 : index
    %2 = vector.load %arg3[%c0_3, %c0_4, %c0_5] : memref<1x1x16xf32, #tpu.memory_space<vmem>>, vector<1x1x16xf32>
    %3 = vector.shape_cast %2 : vector<1x1x16xf32> to vector<1x16xf32>
    %4 = vector.shape_cast %3 : vector<1x16xf32> to vector<1x1x16xf32>
    %5 = vector.broadcast %4 : vector<1x1x16xf32> to vector<8x8x16xf32>
    %6 = arith.mulf %1, %5 : vector<8x8x16xf32>
    %cst = arith.constant dense<0.000000e+00> : vector<8x8xf32>
    %7 = vector.multi_reduction <add>, %6, %cst [2] : vector<8x8x16xf32> to vector<8x8xf32>
    %c0_6 = arith.constant 0 : index
    %c0_7 = arith.constant 0 : index
    %c0_8 = arith.constant 0 : index
    %8 = vector.load %arg2[%c0_6, %c0_7, %c0_8] : memref<1x8x8xf32, #tpu.memory_space<vmem>>, vector<1x8x8xf32>
    %9 = vector.shape_cast %8 : vector<1x8x8xf32> to vector<8x8xf32>
    %cst_9 = arith.constant 0.000000e+00 : f32
    %10 = vector.broadcast %cst_9 : f32 to vector<8x8xf32>
    %11 = arith.cmpf oeq, %9, %10 : vector<8x8xf32>
    %cst_10 = arith.constant -1.000000e+30 : f32
    %12 = vector.broadcast %cst_10 : f32 to vector<8x8xf32>
    %13 = arith.select %11, %12, %7 : vector<8x8xi1>, vector<8x8xf32>
    %cst_11 = arith.constant dense<0xFF800000> : vector<8xf32>
    %14 = vector.multi_reduction <maximumf>, %13, %cst_11 [0] : vector<8x8xf32> to vector<8xf32>
    %15 = vector.shape_cast %14 : vector<8xf32> to vector<1x8xf32>
    %16 = vector.broadcast %15 : vector<1x8xf32> to vector<8x8xf32>
    %17 = arith.subf %13, %16 : vector<8x8xf32>
    %18 = math.exp %17 : vector<8x8xf32>
    %cst_12 = arith.constant dense<0.000000e+00> : vector<8xf32>
    %19 = vector.multi_reduction <add>, %18, %cst_12 [0] : vector<8x8xf32> to vector<8xf32>
    %20 = vector.shape_cast %19 : vector<8xf32> to vector<1x8xf32>
    %21 = vector.broadcast %20 : vector<1x8xf32> to vector<8x8xf32>
    %22 = arith.divf %18, %21 : vector<8x8xf32>
    %c0_13 = arith.constant 0 : index
    %c0_14 = arith.constant 0 : index
    %c0_15 = arith.constant 0 : index
    %23 = vector.load %arg4[%c0_13, %c0_14, %c0_15] : memref<1x1x8xf32, #tpu.memory_space<vmem>>, vector<1x1x8xf32>
    %24 = vector.shape_cast %23 : vector<1x1x8xf32> to vector<1x8xf32>
    %25 = vector.broadcast %24 : vector<1x8xf32> to vector<8x8xf32>
    %26 = arith.mulf %22, %25 : vector<8x8xf32>
    %cst_16 = arith.constant dense<0.000000e+00> : vector<8xf32>
    %27 = vector.multi_reduction <add>, %26, %cst_16 [1] : vector<8x8xf32> to vector<8xf32>
    %28 = vector.shape_cast %27 : vector<8xf32> to vector<8x1xf32>
    %c0_17 = arith.constant 0 : index
    %c0_18 = arith.constant 0 : index
    %c0_19 = arith.constant 0 : index
    %29 = vector.load %arg5[%c0_17, %c0_18, %c0_19] : memref<1x8x1xf32, #tpu.memory_space<vmem>>, vector<1x8x1xf32>
    %30 = vector.shape_cast %29 : vector<1x8x1xf32> to vector<8x1xf32>
    %31 = vector.shape_cast %28 : vector<8x1xf32> to vector<1x8x1xf32>
    tpu.vector_store %arg5[%c0_17, %c0_18, %c0_19], %31 {strides = array<i32>} : memref<1x8x1xf32, #tpu.memory_space<vmem>>, vector<1x8x1xf32>,
    return
  }
  func.func @transform_0(%arg0: i32) -> (i32, i32, i32, i32) {
    %c0_i32 = arith.constant 0 : i32
    %c0_i32_0 = arith.constant 0 : i32
    %c0_i32_1 = arith.constant 0 : i32
    %c0_i32_2 = arith.constant 0 : i32
    return %arg0, %c0_i32, %c0_i32_0, %c0_i32_1 : i32, i32, i32, i32
  }
  func.func @transform_1(%arg0: i32) -> (i32, i32, i32) {
    %c0_i32 = arith.constant 0 : i32
    %c0_i32_0 = arith.constant 0 : i32
    %c0_i32_1 = arith.constant 0 : i32
    return %arg0, %c0_i32, %c0_i32_0 : i32, i32, i32
  }
  func.func @transform_2(%arg0: i32) -> (i32, i32, i32) {
    %c0_i32 = arith.constant 0 : i32
    %c0_i32_0 = arith.constant 0 : i32
    %c0_i32_1 = arith.constant 0 : i32
    return %arg0, %c0_i32, %c0_i32_0 : i32, i32, i32
  }
  func.func @transform_3(%arg0: i32) -> (i32, i32, i32) {
    %c0_i32 = arith.constant 0 : i32
    %c0_i32_0 = arith.constant 0 : i32
    %c0_i32_1 = arith.constant 0 : i32
    return %arg0, %c0_i32, %c0_i32_0 : i32, i32, i32
  }
  func.func @transform_4(%arg0: i32) -> (i32, i32, i32) {
    %c0_i32 = arith.constant 0 : i32
    %c0_i32_0 = arith.constant 0 : i32
    %c0_i32_1 = arith.constant 0 : i32
    return %arg0, %c0_i32, %c0_i32_0 : i32, i32, i32
  }
}

</mosaic_0001>

<llo_original>
// kernel: tpu_custom_call.1
$region0: #{tpu_custom_call.1}
  #allocation0 [shape = 'u32[]', space=smem, size = 0x4, offset = 0x4, fixed_abs, tag = 'smem constant byte address 0x4 - core index']
  #allocation1 [shape = 'u32[144,128]{1,0:T(1,128)}', space=vmem, size = 0x12000, scoped, tag = 'internal scratch']
  %s0 = inlined_call_operand.hbm [shape: f32[2,8,8,16], index: 0, kind: input, shape index: {}]
  %s1 = inlined_call_operand.hbm [shape: f32[2,8,8], index: 1, kind: input, shape index: {}]
  %s2 = inlined_call_operand.vmem [shape: f32[2,1,16], index: 2, kind: input, shape index: {}]
  %s3 = inlined_call_operand.vmem [shape: f32[2,1,8], index: 3, kind: input, shape index: {}]
  %s4 = inlined_call_operand.vmem [shape: f32[2,8,1], index: 4, kind: output, shape index: {}]
  %s5 = sld [smem:[#allocation0]]
  $region57: #{tpu_custom_call.1} parent=0
    _
  %s7 = ssub.s32 1, %s5
  %s8 = scalar_select 0, %s7, %s5
  $region1: #{tpu_custom_call.1} parent=0
    #allocation2 [shape = 'u8[65536]{0}', space=vmem, size = 0x10000, scoped, tag = 'input window, operand 0']
    #allocation3 [shape = 's32[2]{0}', space=sflag, size = 0x8, scoped, tag = 'scoped memory for tpu_custom_call.1']
    #allocation4 [shape = 'u8[8192]{0}', space=vmem, size = 0x2000, scoped, tag = 'input window, operand 1']
    #allocation5 [shape = 's32[2]{0}', space=sflag, size = 0x8, scoped, tag = 'scoped memory for tpu_custom_call.1']
    %9 = vsyncpa [#allocation3], 0
    %s10 = scalar_lea.sflag [#allocation3], 1
    %11 = vsyncpa %s10, 0
    %12 = vsyncpa [#allocation5], 0
    %s13 = scalar_lea.sflag [#allocation5], 1
    %14 = vsyncpa %s13, 0
    loop: start=0, step=1, limit=4
    $region2: #{tpu_custom_call.1} parent=1 // loop_pre_header
      _
    $region3: #{tpu_custom_call.1} parent=1 // loop_header
      %s16 = sphi 0, %s20
      %p17 = scmp.ge.s32.totalorder %s16, 4
      %s26 = sphi 0, %s28
      %s29 = sphi 0, %s26
      %s30 = sphi 0, %s29
      %s46 = sphi 0, %s30
      %s52 = sphi 0, %s54
      %s55 = sphi 0, %s52
      %s56 = sphi 0, %s55
      %s72 = sphi 0, %s56
      %s78 = sphi 0, %s80
      %s81 = sphi 0, %s78
      %s82 = sphi 0, %s81
      %s98 = sphi 0, %s82
      %s104 = sphi 0, %s106
      %s107 = sphi 0, %s104
      %s108 = sphi 0, %s107
      %s124 = sphi 0, %s108
      %s130 = sphi 0, %s132
      %s133 = sphi 0, %s130
      %s134 = sphi 0, %s133
      %s150 = sphi 0, %s134
    $region4: #{tpu_custom_call.1} parent=1 // loop_header_branch
      %19 = sbr.rel (%p17) target = $region8
    $region5: #{tpu_custom_call.1} parent=1 // loop_body
      %s21 = ssub.s32 %s16, 1
      %s22 = ssub.s32 %s16, 2
      %s23 = sadd.s32 %s16, 1
      %s24 = ssub.s32 %s16, %s23
      %p25 = scmp.eq.s32.totalorder %s24, 0
      %s27 = sadd.s32 %s26, 1
      %s28 = scalar_select %p25, %s26, %s27
      %p31 = pneg %p25
      %p32 = scmp.eq.s32.totalorder %s16, 1
      %p33 = por %p31, %p32
      %p34 = scmp.ne.s32.totalorder %s26, %s29
      %p35 = scmp.eq.s32.totalorder %s16, 0
      %p36 = por %p34, %p35
      %p37 = scmp.ne.s32.totalorder %s26, %s29
      %p38 = scmp.eq.s32.totalorder %s21, 1
      %p39 = por %p37, %p38
      %p40 = scmp.ne.s32.totalorder %s29, %s30
      %p41 = scmp.eq.s32.totalorder %s21, 0
      %p42 = por %p40, %p41
      %p43 = scmp.ne.s32.totalorder %s29, %s30
      %p44 = scmp.eq.s32.totalorder %s22, 1
      %p45 = por %p43, %p44
      %p47 = scmp.ne.s32.totalorder %s30, %s46
      %p48 = scmp.eq.s32.totalorder %s22, 0
      %p49 = por %p47, %p48
      %s50 = ssub.s32 %s16, %s23
      %p51 = scmp.eq.s32.totalorder %s50, 0
      %s53 = sadd.s32 %s52, 1
      %s54 = scalar_select %p51, %s52, %s53
      %p57 = pneg %p51
      %p58 = scmp.eq.s32.totalorder %s16, 1
      %p59 = por %p57, %p58
      %p60 = scmp.ne.s32.totalorder %s52, %s55
      %p61 = scmp.eq.s32.totalorder %s16, 0
      %p62 = por %p60, %p61
      %p63 = scmp.ne.s32.totalorder %s52, %s55
      %p64 = scmp.eq.s32.totalorder %s21, 1
      %p65 = por %p63, %p64
      %p66 = scmp.ne.s32.totalorder %s55, %s56
      %p67 = scmp.eq.s32.totalorder %s21, 0
      %p68 = por %p66, %p67
      %p69 = scmp.ne.s32.totalorder %s55, %s56
      %p70 = scmp.eq.s32.totalorder %s22, 1
      %p71 = por %p69, %p70
      %p73 = scmp.ne.s32.totalorder %s56, %s72
      %p74 = scmp.eq.s32.totalorder %s22, 0
      %p75 = por %p73, %p74
      %s76 = ssub.s32 %s16, %s23
      %p77 = scmp.eq.s32.totalorder %s76, 0
      %s79 = sadd.s32 %s78, 1
      %s80 = scalar_select %p77, %s78, %s79
      %p83 = pneg %p77
      %p84 = scmp.eq.s32.totalorder %s16, 1
      %p85 = por %p83, %p84
      %p86 = scmp.ne.s32.totalorder %s78, %s81
      %p87 = scmp.eq.s32.totalorder %s16, 0
      %p88 = por %p86, %p87
      %p89 = scmp.ne.s32.totalorder %s78, %s81
      %p90 = scmp.eq.s32.totalorder %s21, 1
      %p91 = por %p89, %p90
      %p92 = scmp.ne.s32.totalorder %s81, %s82
      %p93 = scmp.eq.s32.totalorder %s21, 0
      %p94 = por %p92, %p93
      %p95 = scmp.ne.s32.totalorder %s81, %s82
      %p96 = scmp.eq.s32.totalorder %s22, 1
      %p97 = por %p95, %p96
      %p99 = scmp.ne.s32.totalorder %s82, %s98
      %p100 = scmp.eq.s32.totalorder %s22, 0
      %p101 = por %p99, %p100
      %s102 = ssub.s32 %s16, %s23
      %p103 = scmp.eq.s32.totalorder %s102, 0
      %s105 = sadd.s32 %s104, 1
      %s106 = scalar_select %p103, %s104, %s105
      %p109 = pneg %p103
      %p110 = scmp.eq.s32.totalorder %s16, 1
      %p111 = por %p109, %p110
      %p112 = scmp.ne.s32.totalorder %s104, %s107
      %p113 = scmp.eq.s32.totalorder %s16, 0
      %p114 = por %p112, %p113
      %p115 = scmp.ne.s32.totalorder %s104, %s107
      %p116 = scmp.eq.s32.totalorder %s21, 1
      %p117 = por %p115, %p116
      %p118 = scmp.ne.s32.totalorder %s107, %s108
      %p119 = scmp.eq.s32.totalorder %s21, 0
      %p120 = por %p118, %p119
      %p121 = scmp.ne.s32.totalorder %s107, %s108
      %p122 = scmp.eq.s32.totalorder %s22, 1
      %p123 = por %p121, %p122
      %p125 = scmp.ne.s32.totalorder %s108, %s124
      %p126 = scmp.eq.s32.totalorder %s22, 0
      %p127 = por %p125, %p126
      %s128 = ssub.s32 %s16, %s23
      %p129 = scmp.eq.s32.totalorder %s128, 0
      %s131 = sadd.s32 %s130, 1
      %s132 = scalar_select %p129, %s130, %s131
      %p135 = pneg %p129
      %p136 = scmp.eq.s32.totalorder %s16, 1
      %p137 = por %p135, %p136
      %p138 = scmp.ne.s32.totalorder %s130, %s133
      %p139 = scmp.eq.s32.totalorder %s16, 0
      %p140 = por %p138, %p139
      %p141 = scmp.ne.s32.totalorder %s130, %s133
      %p142 = scmp.eq.s32.totalorder %s21, 1
      %p143 = por %p141, %p142
      %p144 = scmp.ne.s32.totalorder %s133, %s134
      %p145 = scmp.eq.s32.totalorder %s21, 0
      %p146 = por %p144, %p145
      %p147 = scmp.ne.s32.totalorder %s133, %s134
      %p148 = scmp.eq.s32.totalorder %s22, 1
      %p149 = por %p147, %p148
      %p151 = scmp.ne.s32.totalorder %s134, %s150
      %p152 = scmp.eq.s32.totalorder %s22, 0
      %p153 = por %p151, %p152
      %p154 = scmp.le.s32.totalorder 1, %s16
      %p155 = scmp.lt.s32.totalorder %s16, 3
      %p156 = pnand %p154, %p155
      %p157 = pneg %p156
      // Predicated region
      $region9: #{tpu_custom_call.1} parent=5 // pred_check
        _
      $region10: #{tpu_custom_call.1} parent=5 // pred_check_branch
        %159 = sbr.rel (%p156) target = $region12
      $region11: #{tpu_custom_call.1} parent=5 // pred_region
        %s160 = ssub.s32 %s16, 1
      $region12: #{tpu_custom_call.1} parent=5 // pred_fallthru
        _
      %p161 = scmp.lt.s32.totalorder %s16, 2
      // Predicated region
      $region13: #{tpu_custom_call.1} parent=5 // pred_check
        %p162 = pneg %p161
      $region14: #{tpu_custom_call.1} parent=5 // pred_check_branch
        %164 = sbr.rel (%p162) target = $region16
      $region15: #{tpu_custom_call.1} parent=5 // pred_region
        // Predicated region
        $region17: #{tpu_custom_call.1} parent=15 // pred_check
          %p165 = pneg %p36
        $region18: #{tpu_custom_call.1} parent=15 // pred_check_branch
          %167 = sbr.rel (%p165) target = $region20
        $region19: #{tpu_custom_call.1} parent=15 // pred_region
          %s168 = sand.u32 %s26, 1
          %s169 = scalar_lea.sflag [#allocation3], %s168
          %s170 = sand.u32 %s26, 1
          %s171 = smul.addr %s170, 64
          %s172 = scalar_lea.vmem [#allocation2], %s171
          %s174 = ssub.s32 1024, 1024
          %175 = vsyncadd %s169, %s174
          %s176 = smul.addr %s16, 8
          %s177 = smul.addr %s176, 128
          %s178 = scalar_lea.hbm %s0, %s177
          %s179 = sshll.u32 %s172, 4
          %s180 = int_to_ptr.vmem [resolvable:$true] %s179
          %185 = dma.hbm_to_vmem [thread:$0]  %s178, 1024, %s180, %s169, 128, 128, 8
        $region20: #{tpu_custom_call.1} parent=15 // pred_fallthru
          _
        // Predicated region
        $region21: #{tpu_custom_call.1} parent=15 // pred_check
          %p186 = pneg %p62
        $region22: #{tpu_custom_call.1} parent=15 // pred_check_branch
          %188 = sbr.rel (%p186) target = $region24
        $region23: #{tpu_custom_call.1} parent=15 // pred_region
          %s189 = sand.u32 %s52, 1
          %s190 = scalar_lea.sflag [#allocation5], %s189
          %s191 = sand.u32 %s52, 1
          %s192 = smul.addr %s191, 8
          %s193 = scalar_lea.vmem [#allocation4], %s192
          %s195 = ssub.s32 128, 128
          %196 = vsyncadd %s190, %s195
          %s197 = smul.addr %s16, 128
          %s198 = scalar_lea.hbm %s1, %s197
          %s200 = sshll.u32 %s193, 4
          %s201 = int_to_ptr.vmem [resolvable:$true] %s200
          %203 = dma.hbm_to_vmem [thread:$0]  %s198, 128, %s201, %s190
        $region24: #{tpu_custom_call.1} parent=15 // pred_fallthru
          _
        // Predicated region
        $region25: #{tpu_custom_call.1} parent=15 // pred_check
          %p204 = pneg %p88
        $region26: #{tpu_custom_call.1} parent=15 // pred_check_branch
          %206 = sbr.rel (%p204) target = $region28
        $region27: #{tpu_custom_call.1} parent=15 // pred_region
          %p207 = scmp.lt.s32.totalorder %s16, 1
          %s208 = scalar_select %p207, %s16, 1
          %s209 = scalar_lea.vmem %s2, %s208
        $region28: #{tpu_custom_call.1} parent=15 // pred_fallthru
          _
        // Predicated region
        $region29: #{tpu_custom_call.1} parent=15 // pred_check
          %p210 = pneg %p114
        $region30: #{tpu_custom_call.1} parent=15 // pred_check_branch
          %212 = sbr.rel (%p210) target = $region32
        $region31: #{tpu_custom_call.1} parent=15 // pred_region
          %p213 = scmp.lt.s32.totalorder %s16, 1
          %s214 = scalar_select %p213, %s16, 1
          %s215 = scalar_lea.vmem %s3, %s214
        $region32: #{tpu_custom_call.1} parent=15 // pred_fallthru
          _
      $region16: #{tpu_custom_call.1} parent=5 // pred_fallthru
        _
      %p216 = scmp.le.s32.totalorder 1, %s16
      %p217 = scmp.lt.s32.totalorder %s16, 3
      %p218 = pnand %p216, %p217
      %p219 = pneg %p218
      // Predicated region
      $region33: #{tpu_custom_call.1} parent=5 // pred_check
        _
      $region34: #{tpu_custom_call.1} parent=5 // pred_check_branch
        %221 = sbr.rel (%p218) target = $region36
      $region35: #{tpu_custom_call.1} parent=5 // pred_region
        %s222 = ssub.s32 %s16, 1
        %s223 = sand.u32 %s29, 1
        %s224 = scalar_lea.sflag [#allocation3], %s223
        %s225 = sand.u32 %s29, 1
        %s226 = smul.addr %s225, 64
        %s227 = scalar_lea.vmem [#allocation2], %s226
        // Predicated region
        $region37: #{tpu_custom_call.1} parent=35 // pred_check
          %p228 = pneg %p42
        $region38: #{tpu_custom_call.1} parent=35 // pred_check_branch
          %230 = sbr.rel (%p228) target = $region40
        $region39: #{tpu_custom_call.1} parent=35 // pred_region
          %231 = dma.done %s224, 1024
        $region40: #{tpu_custom_call.1} parent=35 // pred_fallthru
          _
        %s232 = sand.u32 %s55, 1
        %s233 = scalar_lea.sflag [#allocation5], %s232
        %s234 = sand.u32 %s55, 1
        %s235 = smul.addr %s234, 8
        %s236 = scalar_lea.vmem [#allocation4], %s235
        // Predicated region
        $region41: #{tpu_custom_call.1} parent=35 // pred_check
          %p237 = pneg %p68
        $region42: #{tpu_custom_call.1} parent=35 // pred_check_branch
          %239 = sbr.rel (%p237) target = $region44
        $region43: #{tpu_custom_call.1} parent=35 // pred_region
          %240 = dma.done %s233, 128
        $region44: #{tpu_custom_call.1} parent=35 // pred_fallthru
          _
        %s241 = sand.u32 %s29, 1
        %s242 = scalar_lea.sflag [#allocation3], %s241
        %s243 = sand.u32 %s29, 1
        %s244 = smul.addr %s243, 64
        %s245 = scalar_lea.vmem [#allocation2], %s244
        %p246 = pneg %p42
        %p247 = pneg %p39
        %s248 = sand.u32 %s55, 1
        %s249 = scalar_lea.sflag [#allocation5], %s248
        %s250 = sand.u32 %s55, 1
        %s251 = smul.addr %s250, 8
        %s252 = scalar_lea.vmem [#allocation4], %s251
        %p253 = pneg %p68
        %p254 = pneg %p65
        %p255 = scmp.lt.s32.totalorder %s21, 1
        %s256 = scalar_select %p255, %s21, 1
        %s257 = scalar_lea.vmem %s2, %s256
        %p258 = pneg %p94
        %p259 = pneg %p91
        %p260 = scmp.lt.s32.totalorder %s21, 1
        %s261 = scalar_select %p260, %s21, 1
        %s262 = scalar_lea.vmem %s3, %s261
        %p263 = pneg %p120
        %p264 = pneg %p117
        %p265 = pneg %p146
        %p266 = pneg %p143
        %p267 = scmp.lt.s32.totalorder %s21, 1
        %s268 = scalar_select %p267, %s21, 1
        %s269 = smul.addr %s268, 8
        %s270 = scalar_lea.vmem %s4, %s269
        %p271 = scmp.lt.s32.totalorder %s21, 1
        %s272 = scalar_select %p271, %s21, 1
        %s273 = scalar_lea.vmem %s2, %s272
        %p274 = scmp.lt.s32.totalorder %s21, 1
        %s275 = scalar_select %p274, %s21, 1
        %s276 = scalar_lea.vmem %s3, %s275
        %p277 = scmp.lt.s32.totalorder %s21, 1
        %s278 = scalar_select %p277, %s21, 1
        %s279 = smul.addr %s278, 8
        %s280 = scalar_lea.vmem %s4, %s279
        %v281 = vld [vmem:[%s227] sm:$0xff]
        %v282 = vld [vmem:[%s227 + $0x8] sm:$0xff]
        %v283 = vld [vmem:[%s227 + $0x10] sm:$0xff]
        %v284 = vld [vmem:[%s227 + $0x18] sm:$0xff]
        %v285 = vld [vmem:[%s227 + $0x20] sm:$0xff]
        %v286 = vld [vmem:[%s227 + $0x28] sm:$0xff]
        %v287 = vld [vmem:[%s227 + $0x30] sm:$0xff]
        %v288 = vld [vmem:[%s227 + $0x38] sm:$0xff]
        %v289 = vld [vmem:[%s273] sm:$0x1]
        %v291 = vlaneseq
        %v292 = vshrl.u32 %v291, 7
        %v293 = vsub.s32 0, %v292
        %v294 = vrot.slane %v289, %v293
        %v296 = vmul.f32 %v281, %v294
        %v297 = vmul.f32 %v282, %v294
        %v298 = vmul.f32 %v283, %v294
        %v299 = vmul.f32 %v284, %v294
        %v300 = vmul.f32 %v285, %v294
        %v301 = vmul.f32 %v286, %v294
        %v302 = vmul.f32 %v287, %v294
        %v303 = vmul.f32 %v288, %v294
        %vm304 = vcmask 130048
        %v305 = vsel %vm304, %v296, 0.0
        %306 = vadd.xlane.f32.xlu0 %v305
        %v307 = vpop.xlane.xlu0 %306
        %v308 = vsel %vm304, %v297, 0.0
        %309 = vadd.xlane.f32.xlu0 %v308
        %v310 = vpop.xlane.xlu0 %309
        %v311 = vsel %vm304, %v298, 0.0
        %312 = vadd.xlane.f32.xlu0 %v311
        %v313 = vpop.xlane.xlu0 %312
        %v314 = vsel %vm304, %v299, 0.0
        %315 = vadd.xlane.f32.xlu0 %v314
        %v316 = vpop.xlane.xlu0 %315
        %v317 = vsel %vm304, %v300, 0.0
        %318 = vadd.xlane.f32.xlu0 %v317
        %v319 = vpop.xlane.xlu0 %318
        %v320 = vsel %vm304, %v301, 0.0
        %321 = vadd.xlane.f32.xlu0 %v320
        %v322 = vpop.xlane.xlu0 %321
        %v323 = vsel %vm304, %v302, 0.0
        %324 = vadd.xlane.f32.xlu0 %v323
        %v325 = vpop.xlane.xlu0 %324
        %v326 = vsel %vm304, %v303, 0.0
        %327 = vadd.xlane.f32.xlu0 %v326
        %v328 = vpop.xlane.xlu0 %327
        %v329 = vld [vmem:[%s236] sm:$0xff]
        %vm330 = vcmp.eq.f32.partialorder %v329, 0.0
        %v339 = vlaneseq
        %v340 = vand.u32 %v339, 127
        %v341 = vlaneseq
        %v342 = vshrl.u32 %v341, 7
        %v343 = vsub.s32 %v340, %v342
        %v344 = vrot.slane %v307, %v343
        %v345 = vlaneseq
        %v346 = vshrl.u32 %v345, 7
        %v347 = vsub.s32 %v340, %v346
        %v348 = vrot.slane %v310, %v347
        %v349 = vlaneseq
        %v350 = vshrl.u32 %v349, 7
        %v351 = vsub.s32 %v340, %v350
        %v352 = vrot.slane %v313, %v351
        %v353 = vlaneseq
        %v354 = vshrl.u32 %v353, 7
        %v355 = vsub.s32 %v340, %v354
        %v356 = vrot.slane %v316, %v355
        %v357 = vlaneseq
        %v358 = vshrl.u32 %v357, 7
        %v359 = vsub.s32 %v340, %v358
        %v360 = vrot.slane %v319, %v359
        %v361 = vlaneseq
        %v362 = vshrl.u32 %v361, 7
        %v363 = vsub.s32 %v340, %v362
        %v364 = vrot.slane %v322, %v363
        %v365 = vlaneseq
        %v366 = vshrl.u32 %v365, 7
        %v367 = vsub.s32 %v340, %v366
        %v368 = vrot.slane %v325, %v367
        %v369 = vlaneseq
        %v370 = vshrl.u32 %v369, 7
        %v371 = vsub.s32 %v340, %v370
        %v372 = vrot.slane %v328, %v371
        %vm373 = vcmask 1041409
        %v374 = vsel %vm373, %v348, %v344
        %vm375 = vcmask 1042434
        %v376 = vsel %vm375, %v352, %v374
        %vm377 = vcmask 1043459
        %v378 = vsel %vm377, %v356, %v376
        %vm379 = vcmask 1044484
        %v380 = vsel %vm379, %v360, %v378
        %vm381 = vcmask 1045509
        %v382 = vsel %vm381, %v364, %v380
        %vm383 = vcmask 1046534
        %v384 = vsel %vm383, %v368, %v382
        %vm385 = vcmask 1047559
        %v386 = vsel %vm385, %v372, %v384
        %v388 = vsel %vm330, -1e+30, %v386
        %vm389 = vcmask 64512
        %v390 = vsel %vm389, %v388, -inf
        %v391 = vrot.slane %v390, 4
        %v392 = vmax.f32 %v390, %v391
        %v393 = vrot.slane %v392, 2
        %v394 = vmax.f32 %v392, %v393
        %v395 = vrot.slane %v394, 1
        %v396 = vmax.f32 %v394, %v395
        %v397 = vsub.f32 %v388, %v396
        %v398 = vmul.f32 %v397, 1.442695
        %v399 = vpow.pop %v398
        %v400 = vsel %vm389, %v399, 0.0
        %v401 = vrot.slane %v400, 4
        %v402 = vadd.f32 %v400, %v401
        %v403 = vrot.slane %v402, 2
        %v404 = vadd.f32 %v402, %v403
        %v405 = vrot.slane %v404, 1
        %v406 = vadd.f32 %v404, %v405
        %v407 = vrcp.pop %v406
        %v408 = vmul.f32 %v399, %v407
        %v409 = vld [vmem:[%s276] sm:$0x1]
        %v411 = vlaneseq
        %v412 = vshrl.u32 %v411, 7
        %v413 = vsub.s32 0, %v412
        %v414 = vrot.slane %v409, %v413
        %v416 = vmul.f32 %v408, %v414
        %v417 = vsel %vm389, %v416, 0.0
        %418 = vadd.xlane.f32.xlu0 %v417
        %v419 = vpop.xlane.xlu0 %418
        %vm420 = vcmask 7168
        %421 = vst.msk [vmem:[%s280] sm:$0xff] %vm420, %v419
        %p422 = scmp.lt.s32.totalorder %s21, 1
        %s423 = scalar_select %p422, %s21, 1
        %s424 = smul.addr %s423, 8
        %s425 = scalar_lea.vmem %s4, %s424
        // Predicated region
        $region45: #{tpu_custom_call.1} parent=35 // pred_check
          %p426 = pneg %p143
        $region46: #{tpu_custom_call.1} parent=35 // pred_check_branch
          %428 = sbr.rel (%p426) target = $region48
        $region47: #{tpu_custom_call.1} parent=35 // pred_region
          _
        $region48: #{tpu_custom_call.1} parent=35 // pred_fallthru
          _
      $region36: #{tpu_custom_call.1} parent=5 // pred_fallthru
        _
      %p429 = scmp.le.s32.totalorder 2, %s16
      // Predicated region
      $region49: #{tpu_custom_call.1} parent=5 // pred_check
        %p430 = pneg %p429
      $region50: #{tpu_custom_call.1} parent=5 // pred_check_branch
        %432 = sbr.rel (%p430) target = $region52
      $region51: #{tpu_custom_call.1} parent=5 // pred_region
        %s433 = ssub.s32 %s16, 2
        // Predicated region
        $region53: #{tpu_custom_call.1} parent=51 // pred_check
          %p434 = pneg %p149
        $region54: #{tpu_custom_call.1} parent=51 // pred_check_branch
          %436 = sbr.rel (%p434) target = $region56
        $region55: #{tpu_custom_call.1} parent=51 // pred_region
          %p437 = scmp.lt.s32.totalorder %s22, 1
          %s438 = scalar_select %p437, %s22, 1
          %s439 = smul.addr %s438, 8
          %s440 = scalar_lea.vmem %s4, %s439
        $region56: #{tpu_custom_call.1} parent=51 // pred_fallthru
          _
      $region52: #{tpu_custom_call.1} parent=5 // pred_fallthru
        _
    $region6: #{tpu_custom_call.1} parent=1 // loop_footer
      %s20 = sadd.s32 1, %s16
    $region7: #{tpu_custom_call.1} parent=1 // loop_footer_branch
      %15 = sbr.rel target = $region3
    $region8: #{tpu_custom_call.1} parent=1 // loop_exit
      _
    %441 = vsyncpa [#allocation3], 1
    %s442 = scalar_lea.sflag [#allocation3], 1
    %443 = vsyncpa %s442, 1
    %444 = vsyncpa [#allocation5], 1
    %s445 = scalar_lea.sflag [#allocation5], 1
    %446 = vsyncpa %s445, 1

</llo_original>
